<compile_context>
chip_gen: v5e
topology: v5e:2x2
jax: 0.10.0
libtpu: 0.0.40
codegen_flags: <defaults>
</compile_context>

<pallas_src>
import jax
import jax.numpy as jnp
from jax.experimental import pallas as pl
from jax.experimental.pallas import tpu as pltpu


def logreg_kernel(x_ref, w_ref, b_ref, o_ref, acc_ref):
    # x_ref:   (TB, TF) f32 VMEM  -- streamed batch x feature tile
    # w_ref:   (1,  TF) f32 VMEM  -- lane-dense weight row slice
    # b_ref:   (1,)     f32 SMEM  -- scalar bias
    # o_ref:   (1,  TB) f32 VMEM  -- lane-dense output slab (unmasked stores)
    # acc_ref: (1,  TB) f32 VMEM  -- partial logits accumulated across F tiles
    f = pl.program_id(1)

    @pl.when(f == 0)
    def _():
        acc_ref[...] = jnp.zeros_like(acc_ref)

    acc_ref[...] += jax.lax.dot_general(
        w_ref[...], x_ref[...],
        dimension_numbers=(((1,), (1,)), ((), ())),   # contract over F -> (1, TB)
        preferred_element_type=jnp.float32,
    )

    @pl.when(f == pl.num_programs(1) - 1)
    def _():
        o_ref[...] = jax.nn.sigmoid(acc_ref[...] + b_ref[0]).astype(o_ref.dtype)


def logistic_regression(x, weight, bias, *, block_b=1024, max_block_f=2048):
    """Pallas equivalent of sigmoid(nn.Linear(F, 1)(x)).

    x:      (B, F) float32
    weight: (1, F) float32   (same layout as torch nn.Linear.weight)
    bias:   (1,)   float32
    returns (B, 1) float32
    """
    B, F = x.shape
    assert weight.shape == (1, F) and bias.shape == (1,)

    # --- feature (reduction) tile ---------------------------------------
    if F <= max_block_f:
        tf = F                       # block == full dim, always layout-legal
        f_pad = F
    else:
        tf = max_block_f             # multiple of 128 -> lane-aligned tiles
        f_pad = pl.cdiv(F, tf) * tf  # zero-pad extra columns (no effect on dot)
    num_f = f_pad // tf

    # --- batch tile: largest that double-buffers the x stream in budget ---
    x_budget = 12 * 1024 * 1024      # ~12 MiB for 2 pipeline bufs of x
    max_rows = max(8, x_budget // (2 * tf * 4))
    tb = min(B, block_b, max_rows)
    if tb < B:
        # Multi-tile: keep the tile a multiple of 128 so the (1, TB) output
        # block stays lane-aligned (unmasked stores) and x tiles stay (8,128)-ok.
        tb = max(128, (tb // 128) * 128)
    num_b = pl.cdiv(B, tb)
    b_pad = num_b * tb

    if b_pad != B or f_pad != F:
        # Padded rows just compute sigmoid(bias) and are sliced off below;
        # padded feature columns are zero in both x and weight.
        x = jnp.pad(x, ((0, b_pad - B), (0, f_pad - F)))
    if f_pad != F:
        weight = jnp.pad(weight, ((0, 0), (0, f_pad - F)))

    out = pl.pallas_call(
        logreg_kernel,
        out_shape=jax.ShapeDtypeStruct((1, b_pad), jnp.float32),
        grid=(num_b, num_f),
        in_specs=[
            pl.BlockSpec((tb, tf), lambda i, k: (i, k)),           # x: streamed tiles
            pl.BlockSpec((1, tf), lambda i, k: (0, k)),            # w: row slice
            pl.BlockSpec(memory_space=pltpu.MemorySpace.SMEM),     # bias scalar
        ],
        out_specs=pl.BlockSpec((1, tb), lambda i, k: (0, i)),      # lane-dense store
        scratch_shapes=[pltpu.VMEM((1, tb), jnp.float32)],         # logit accumulator
        compiler_params=pltpu.CompilerParams(
            dimension_semantics=("parallel", "arbitrary"),  # batch || , F reduction
            vmem_limit_bytes=32 * 1024 * 1024,
        ),
    )(x, weight, bias)

    # (1, B_pad) lane-dense slab -> (B, 1) column, matching nn.Linear output.
    return out.reshape(b_pad, 1)[:B]


if __name__ == "__main__":
    key = jax.random.PRNGKey(0)
    kx, kw, kb = jax.random.split(key, 3)

    batch = 8
    n_input_features = 32

    # nn.Linear(n_input_features, 1) parameter shapes/init
    bound = 1.0 / jnp.sqrt(n_input_features)
    weight = jax.random.uniform(kw, (1, n_input_features), jnp.float32, -bound, bound)
    bias = jax.random.uniform(kb, (1,), jnp.float32, -bound, bound)

    x = jax.random.normal(kx, (batch, n_input_features), jnp.float32)

    y = logistic_regression(x, weight, bias)
    y = jax.block_until_ready(y)

    # Pure-JAX reference: sigmoid(x @ W^T + b)
    y_ref = jax.nn.sigmoid(x @ weight.T + bias)
    assert y.shape == (batch, 1)
    assert jnp.allclose(y, y_ref, atol=1e-5, rtol=1e-5)

    print("KERNEL_OK")
</pallas_src>

<mosaic_0001>
module attributes {stable_mosaic.version = 11 : i64} {
  func.func @logreg_kernel(%arg0: i32, %arg1: i32, %arg2: memref<8x32xf32, #tpu.memory_space<vmem>>, %arg3: memref<1x32xf32, #tpu.memory_space<vmem>>, %arg4: memref<1xf32, #tpu.memory_space<smem>>, %arg5: memref<1x8xf32, #tpu.memory_space<vmem>>, %arg6: memref<1x8xf32, #tpu.memory_space<vmem>>) attributes {dimension_semantics = [#tpu.dimension_semantics<parallel>, #tpu.dimension_semantics<arbitrary>], iteration_bounds = array<i64: 1, 1>, scalar_prefetch = 0 : i64, scratch_operands = 1 : i64, tpu.core_type = #tpu.core_type<tc>, window_params = [{transform_indices = @transform_0, window_bounds = array<i64: 8, 32>}, {transform_indices = @transform_1, window_bounds = array<i64: 1, 32>}, {transform_indices = @transform_2, window_bounds = array<i64: 1>}, {transform_indices = @transform_3, window_bounds = array<i64: 1, 8>}]} {
    %c0_i32 = arith.constant 0 : i32
    %0 = arith.cmpi eq, %arg1, %c0_i32 : i32
    %1 = arith.extui %0 : i1 to i32
    %c0_i32_0 = arith.constant 0 : i32
    %2 = arith.cmpi ne, %1, %c0_i32_0 : i32
    scf.if %2 {
      %cst_10 = arith.constant 0.000000e+00 : f32
      %12 = vector.broadcast %cst_10 : f32 to vector<1x8xf32>
      %c0_11 = arith.constant 0 : index
      %c0_12 = arith.constant 0 : index
      %13 = vector.load %arg6[%c0_11, %c0_12] : memref<1x8xf32, #tpu.memory_space<vmem>>, vector<1x8xf32>
      tpu.vector_store %arg6[%c0_11, %c0_12], %12 {strides = array<i32>} : memref<1x8xf32, #tpu.memory_space<vmem>>, vector<1x8xf32>,
    } else {
    }
    %c0 = arith.constant 0 : index
    %c0_1 = arith.constant 0 : index
    %3 = vector.load %arg6[%c0, %c0_1] : memref<1x8xf32, #tpu.memory_space<vmem>>, vector<1x8xf32>
    %c0_2 = arith.constant 0 : index
    %c0_3 = arith.constant 0 : index
    %4 = vector.load %arg3[%c0_2, %c0_3] : memref<1x32xf32, #tpu.memory_space<vmem>>, vector<1x32xf32>
    %c0_4 = arith.constant 0 : index
    %c0_5 = arith.constant 0 : index
    %5 = vector.load %arg2[%c0_4, %c0_5] : memref<8x32xf32, #tpu.memory_space<vmem>>, vector<8x32xf32>
    %cst = arith.constant dense<0.000000e+00> : vector<1x8xf32>
    %6 = tpu.matmul %4, %5, %cst {dimension_numbers = #tpu.dot_dimension_numbers<[1], [1], [0], [0], [0, 0, 1, 0], [], []>} : vector<1x32xf32>, vector<8x32xf32>, vector<1x8xf32> -> vector<1x8xf32>
    %7 = arith.addf %3, %6 : vector<1x8xf32>
    %c0_6 = arith.constant 0 : index
    %c0_7 = arith.constant 0 : index
    %8 = vector.load %arg6[%c0_6, %c0_7] : memref<1x8xf32, #tpu.memory_space<vmem>>, vector<1x8xf32>
    tpu.vector_store %arg6[%c0_6, %c0_7], %7 {strides = array<i32>} : memref<1x8xf32, #tpu.memory_space<vmem>>, vector<1x8xf32>,
    %c0_i32_8 = arith.constant 0 : i32
    %9 = arith.cmpi eq, %arg1, %c0_i32_8 : i32
    %10 = arith.extui %9 : i1 to i32
    %c0_i32_9 = arith.constant 0 : i32
    %11 = arith.cmpi ne, %10, %c0_i32_9 : i32
    scf.if %11 {
      %c0_10 = arith.constant 0 : index
      %c0_11 = arith.constant 0 : index
      %12 = vector.load %arg6[%c0_10, %c0_11] : memref<1x8xf32, #tpu.memory_space<vmem>>, vector<1x8xf32>
      %c0_12 = arith.constant 0 : index
      %13 = memref.load %arg4[%c0_12] : memref<1xf32, #tpu.memory_space<smem>>
      %14 = vector.broadcast %13 : f32 to vector<1x8xf32>
      %15 = arith.addf %12, %14 : vector<1x8xf32>
      %16 = arith.negf %15 : vector<1x8xf32>
      %17 = math.exp %16 : vector<1x8xf32>
      %cst_13 = arith.constant 1.000000e+00 : f32
      %18 = vector.broadcast %cst_13 : f32 to vector<1x8xf32>
      %19 = arith.addf %18, %17 : vector<1x8xf32>
      %20 = arith.divf %18, %19 : vector<1x8xf32>
      %c0_14 = arith.constant 0 : index
      %c0_15 = arith.constant 0 : index
      %21 = vector.load %arg5[%c0_14, %c0_15] : memref<1x8xf32, #tpu.memory_space<vmem>>, vector<1x8xf32>
      tpu.vector_store %arg5[%c0_14, %c0_15], %20 {strides = array<i32>} : memref<1x8xf32, #tpu.memory_space<vmem>>, vector<1x8xf32>,
    } else {
    }
    return
  }
  func.func @transform_0(%arg0: i32, %arg1: i32) -> (i32, i32) {
    %c0_i32 = arith.constant 0 : i32
    return %arg0, %arg1 : i32, i32
  }
  func.func @transform_1(%arg0: i32, %arg1: i32) -> (i32, i32) {
    %c0_i32 = arith.constant 0 : i32
    %c0_i32_0 = arith.constant 0 : i32
    return %c0_i32, %arg1 : i32, i32
  }
  func.func @transform_2(%arg0: i32, %arg1: i32) -> i32 {
    %c0_i32 = arith.constant 0 : i32
    %c0_i32_0 = arith.constant 0 : i32
    return %c0_i32 : i32
  }
  func.func @transform_3(%arg0: i32, %arg1: i32) -> (i32, i32) {
    %c0_i32 = arith.constant 0 : i32
    %c0_i32_0 = arith.constant 0 : i32
    return %c0_i32, %arg0 : i32, i32
  }
}

</mosaic_0001>

<llo_original>
// kernel: tpu_custom_call.1
$region0: #{tpu_custom_call.1}
  #allocation0 [shape = 'u32[]', space=smem, size = 0x4, offset = 0x4, fixed_abs, tag = 'smem constant byte address 0x4 - core index']
  #allocation1 [shape = 'u32[72,128]{1,0:T(1,128)}', space=vmem, size = 0x9000, scoped, tag = 'internal scratch']
  #allocation2 [shape = 'f32[1,8]{1,0:T(1,128)}', space=vmem, size = 0x200, scoped, tag = 'scratch operand']
  #allocation3 [shape = 'f32[1]{0:T(128)S(6)}', space=smem, size = 0x200, scoped, tag = 'scoped memory for tpu_custom_call.1']
  %s0 = inlined_call_operand.hbm [shape: f32[8,32], index: 0, kind: input, shape index: {}]
  %s1 = inlined_call_operand.vmem [shape: f32[1,32], index: 1, kind: input, shape index: {}]
  %s2 = inlined_call_operand.<no memory space> [shape: f32[1], index: 2, kind: input, shape index: {}]
  %s3 = inlined_call_operand.hbm [shape: f32[1,8], index: 3, kind: output, shape index: {}]
  %s4 = sld [smem:[#allocation0]]
  $region34: #{tpu_custom_call.1} parent=0
    _
  %s6 = ssub.s32 1, %s4
  %s7 = scalar_select 0, %s6, %s4
  %8 = sst [smem:[#allocation3]] %s2
  $region1: #{tpu_custom_call.1} parent=0
    #allocation4 [shape = 'u8[4096]{0}', space=vmem, size = 0x1000, scoped, tag = 'input window, operand 0, single buffered']
    #allocation5 [shape = 's32[1]{0}', space=sflag, size = 0x4, scoped, tag = 'scoped memory for tpu_custom_call.1']
    #allocation6 [shape = 's32[1]{0}', space=sflag, size = 0x4, scoped, tag = 'scoped memory for tpu_custom_call.1']
    #allocation7 [shape = 'u8[512]{0}', space=vmem, size = 0x400, scoped, tag = 'output window, operand 0, single buffered']
    %9 = vsyncpa [#allocation5], 0
    %10 = vsyncpa [#allocation6], 0
    // Predicated region
    $region2: #{tpu_custom_call.1} parent=1 // pred_check
      _
    $region3: #{tpu_custom_call.1} parent=1 // pred_check_branch
      %12 = sbr.rel (0) target = $region5
    $region4: #{tpu_custom_call.1} parent=1 // pred_region
      %14 = vsyncadd [#allocation5], 0
      %s16 = sshll.u32 %s0, 4
      %s17 = int_to_ptr.hbm [resolvable:$true] %s16
      %s18 = sshll.u32 [#allocation4], 4
      %s19 = int_to_ptr.vmem [resolvable:$true] %s18
      %21 = dma.hbm_to_vmem [thread:$0]  %s17, 128, %s19, [#allocation5]
    $region5: #{tpu_custom_call.1} parent=1 // pred_fallthru
      _
    // Predicated region
    $region6: #{tpu_custom_call.1} parent=1 // pred_check
      _
    $region7: #{tpu_custom_call.1} parent=1 // pred_check_branch
      %23 = sbr.rel (0) target = $region9
    $region8: #{tpu_custom_call.1} parent=1 // pred_region
      _
    $region9: #{tpu_custom_call.1} parent=1 // pred_fallthru
      _
    // Predicated region
    $region10: #{tpu_custom_call.1} parent=1 // pred_check
      _
    $region11: #{tpu_custom_call.1} parent=1 // pred_check_branch
      %25 = sbr.rel (0) target = $region13
    $region12: #{tpu_custom_call.1} parent=1 // pred_region
      _
    $region13: #{tpu_custom_call.1} parent=1 // pred_fallthru
      _
    // Predicated region
    $region14: #{tpu_custom_call.1} parent=1 // pred_check
      _
    $region15: #{tpu_custom_call.1} parent=1 // pred_check_branch
      %27 = sbr.rel (0) target = $region17
    $region16: #{tpu_custom_call.1} parent=1 // pred_region
      %29 = dma.done [#allocation5], 128
    $region17: #{tpu_custom_call.1} parent=1 // pred_fallthru
      _
    %p30 = scmp.eq.s32.totalorder 0, 0
    // Predicated region
    $region18: #{tpu_custom_call.1} parent=1 // pred_check
      %p31 = pneg %p30
    $region19: #{tpu_custom_call.1} parent=1 // pred_check_branch
      %33 = sbr.rel (%p31) target = $region21
    $region20: #{tpu_custom_call.1} parent=1 // pred_region
      %vm34 = vcmask 57344
      %35 = vst.msk [vmem:[#allocation2] sm:$0x1] %vm34, 0.0
    $region21: #{tpu_custom_call.1} parent=1 // pred_fallthru
      _
    %v36 = vld [vmem:[#allocation2] sm:$0x1]
    %v37 = vld [vmem:[%s1] sm:$0x1]
    %v38 = vld [vmem:[#allocation4] sm:$0xff]
    %vm39 = vcmask 261120
    %v41 = vsel %vm39, %v37, 0
    %v44 = vsel %vm39, %v38, 0
    %46 = vmatpush.xpose.msra.mxu0 0.0
    %47 = vmatpush.xpose.msra.mxu0 0.0
    %48 = vmatpush.xpose.msra.mxu0 0.0
    %49 = vmatpush.xpose.msra.mxu0 0.0
    %50 = vmatpush.xpose.msra.mxu0 0.0
    %51 = vmatpush.xpose.msra.mxu0 0.0
    %52 = vmatpush.xpose.msra.mxu0 0.0
    %53 = vmatpush.xpose.msra.mxu0 0.0
    %54 = vmatpush.xpose.msra.mxu0 0.0
    %55 = vmatpush.xpose.msra.mxu0 0.0
    %56 = vmatpush.xpose.msra.mxu0 0.0
    %57 = vmatpush.xpose.msra.mxu0 0.0
    %58 = vmatpush.xpose.msra.mxu0 0.0
    %59 = vmatpush.xpose.msra.mxu0 0.0
    %60 = vmatpush.xpose.msra.mxu0 0.0
    %61 = vmatpush.xpose.msra.mxu0 %v44
    %62 = vmatmul.f32.gmra.mxu0 %v41
    %v63 = vpop.f32.mrf.mxu0
    %v64 = vadd.f32 0.0, %v63
    %65 = vdwg.mxu0
    %v66 = vadd.f32 %v36, %v64
    %vm67 = vcmask 57344
    %68 = vst.msk [vmem:[#allocation2] sm:$0x1] %vm67, %v66
    // Predicated region
    $region22: #{tpu_custom_call.1} parent=1 // pred_check
      %p69 = pneg %p30
    $region23: #{tpu_custom_call.1} parent=1 // pred_check_branch
      %71 = sbr.rel (%p69) target = $region25
    $region24: #{tpu_custom_call.1} parent=1 // pred_region
      %v72 = vld [vmem:[#allocation2] sm:$0x1]
      %s73 = sld [smem:[#allocation3]]
      %v74 = vstv %s73
      %v75 = vadd.f32 %v72, %v74
      %v76 = vxor.u32 %v75, 2147483648
      %v77 = vmul.f32 %v76, 1.442695
      %v78 = vpow.pop %v77
      %v79 = vadd.f32 %v78, 1.0
      %v80 = vrcp.pop %v79
      %v81 = vmul.f32 %v79, %v80
      %v82 = vsub.f32 1.0, %v81
      %v83 = vmul.f32 %v80, %v82
      %v84 = vadd.f32 %v80, %v83
      %vm85 = vweird.f32 %v79
      %vm86 = vweird.f32 %v80
      %vm87 = vmor %vm85, %vm86
      %v88 = vsel %vm87, %v80, %v84
      %v89 = vand.u32 2147483647, %v79
      %vm90 = vcmp.eq.f32.partialorder %v89, 8.507059e+37
      %v91 = vand.u32 %v79, 2147483648
      %v92 = vor.u32 1.1754944e-38, %v91
      %v93 = vsel %vm90, %v92, %v88
      %v94 = vmul.f32 1.0, %v93
      %95 = vst.msk [vmem:[#allocation7] sm:$0x1] %vm67, %v94
    $region25: #{tpu_custom_call.1} parent=1 // pred_fallthru
      _
    // Predicated region
    $region26: #{tpu_custom_call.1} parent=1 // pred_check
      _
    $region27: #{tpu_custom_call.1} parent=1 // pred_check_branch
      %97 = sbr.rel (0) target = $region29
    $region28: #{tpu_custom_call.1} parent=1 // pred_region
      %99 = vsyncadd [#allocation6], 0
      %s101 = sshll.u32 [#allocation7], 4
      %s102 = int_to_ptr.vmem [resolvable:$true] %s101
      %s103 = sshll.u32 %s3, 4
      %s104 = int_to_ptr.hbm [resolvable:$true] %s103
      %106 = dma.vmem_to_hbm [thread:$0]  %s102, 16, %s104, [#allocation6]
    $region29: #{tpu_custom_call.1} parent=1 // pred_fallthru
      _
    // Predicated region
    $region30: #{tpu_custom_call.1} parent=1 // pred_check
      _
    $region31: #{tpu_custom_call.1} parent=1 // pred_check_branch
      %108 = sbr.rel (0) target = $region33
    $region32: #{tpu_custom_call.1} parent=1 // pred_region
      %110 = dma.done [#allocation6], 16
    $region33: #{tpu_custom_call.1} parent=1 // pred_fallthru
      _
    %111 = vsyncpa [#allocation5], 1
    %112 = vsyncpa [#allocation6], 1

</llo_original>
